<compile_context>
chip_gen: v7x
topology: tpu7x:2x2x1
jax: 0.10.0
libtpu: 0.0.40
codegen_flags: <defaults>
</compile_context>

<pallas_src>
import functools

import jax
import jax.numpy as jnp
from jax.experimental import pallas as pl
from jax.experimental.pallas import tpu as pltpu


# --------------------------------------------------------------------------------------
# Small host-side helpers (all static / Python ints).
# --------------------------------------------------------------------------------------
def _sublane_align(dtype):
    # Minimum sublane tile per dtype: f32 -> 8, bf16 -> 16, int8/fp8 -> 32.
    return {4: 8, 2: 16, 1: 32}.get(jnp.dtype(dtype).itemsize, 8)


def _vmem_capacity_bytes():
    try:
        return int(pltpu.get_tpu_info().vmem_capacity_bytes)
    except Exception:
        return 64 << 20  # conservative fallback (v7x physical VMEM per TensorCore)


def _pick_rows(M, upper, align):
    """Largest r <= upper with r | M and align | r.  Prefer an even number of blocks
    (megacore sharding on v7x) when that costs at most a 2x smaller tile.  Falls back to a
    single full-size block (block shape == full array dims is always legal)."""
    upper = max(align, min(M, upper))
    start = upper - (upper % align)
    best = None
    best_even = None
    for r in range(start, 0, -align):
        if M % r:
            continue
        if best is None:
            best = r
        if (M // r) % 2 == 0:
            best_even = r
            break
    if best is None:
        return M
    if best_even is not None and 2 * best_even >= best:
        return best_even
    return best


def _pick_group(total_rows, k_min, unit):
    """Smallest k >= k_min with k | total_rows, preferring k*unit % 128 == 0 (unmasked vst)."""
    k_min = max(1, k_min)
    best = None
    for k in range(k_min, min(total_rows, 128 * k_min) + 1):
        if total_rows % k:
            continue
        if (k * unit) % 128 == 0:
            return k
        if best is None:
            best = k
    return best if best is not None else 1


def _make_rep(W, sf, k, row_rep):
    """0/1 replication matrix (exact in bf16).

    row_rep=True : block-diagonal (k*W, k*sf*sf*W); block g maps input column w to all sf*sf
                   positions of the super-row of folded row g (column + row replication).
    row_rep=False: (W, sf*W) column upsample only (the kernel stores the result sf times)."""
    if row_rep:
        out_w = k * sf * sf * W
        j = jnp.arange(out_w)
        g = j // (sf * sf * W)
        c = (j % (sf * sf * W)) % (sf * W)
        src = g * W + c // sf
        rows = k * W
    else:
        src = jnp.arange(sf * W) // sf
        rows = W
    return (jnp.arange(rows)[:, None] == src[None, :]).astype(jnp.bfloat16)


# --------------------------------------------------------------------------------------
# Kernels.
# --------------------------------------------------------------------------------------
def _store_upsampled(o_ref, res, sf, row_rep):
    if row_rep:
        o_ref[...] = res                     # rep already contains the sf row copies
    else:
        w = res.shape[-1]                    # sf*W >= 128: each slice store is lane-dense
        for r in range(sf):                  # static unrolled loop (sf is small)
            o_ref[:, r * w:(r + 1) * w] = res


def _pass2_kernel(scale_ref, x_ref, rep_ref, o_ref, *, sf, row_rep):
    # scale_ref (SMEM, f32[2]) = [1/scale, scale], scale = amax/127 (guarded for amax == 0).
    inv_scale = scale_ref[0]
    scale = scale_ref[1]
    x = x_ref[...].astype(jnp.float32)
    codes = jnp.clip(jnp.round(x * inv_scale), -127.0, 127.0)
    # Integer codes (|v| <= 127) and the 0/1 one-hot rep are exact in bf16 and each output
    # column has exactly one nonzero, so the bf16 MXU matmul (f32 acc) is bit-exact.
    up = jnp.dot(codes.astype(jnp.bfloat16), rep_ref[...],
                 preferred_element_type=jnp.float32)
    _store_upsampled(o_ref, (up * scale).astype(o_ref.dtype), sf, row_rep)


def _fused_kernel(x_ref, rep_ref, o_ref, *, sf, row_rep):
    # Single-step fast path: x is resident in VMEM, so amax + quant + upsample reuse one load.
    x = x_ref[...].astype(jnp.float32)
    amax = jnp.max(jnp.abs(x))
    scale = amax / 127.0
    safe = jnp.where(scale > 0.0, scale, 1.0)            # amax == 0 -> all-zero output
    codes = jnp.clip(jnp.round(x * (1.0 / safe)), -127.0, 127.0)
    up = jnp.dot(codes.astype(jnp.bfloat16), rep_ref[...],
                 preferred_element_type=jnp.float32)
    _store_upsampled(o_ref, (up * safe).astype(o_ref.dtype), sf, row_rep)


def _amax_partial_kernel(x_ref, part_ref):
    part_ref[...] = jnp.broadcast_to(
        jnp.max(jnp.abs(x_ref[...].astype(jnp.float32))), part_ref.shape)


def _amax_pallas(x, align, vmem_limit):
    """abs-max of x over its own lane-dense flat view (decoupled from pass-2 tiling)."""
    total = x.size
    itemsize = jnp.dtype(x.dtype).itemsize
    for lanes in (1024, 512, 256, 128):
        if total % lanes == 0 and (total // lanes) % align == 0:
            break
    else:
        return jnp.max(jnp.abs(x))           # awkward size: let XLA reduce at roofline
    rows = total // lanes
    upper = max(align, (4 << 20) // (lanes * itemsize))   # ~4 MiB blocks (read-only pass)
    r = _pick_rows(rows, upper, align)
    nb = rows // r
    partials = pl.pallas_call(
        _amax_partial_kernel,
        out_shape=jax.ShapeDtypeStruct((nb, 1, 1), jnp.float32),
        grid=(nb,),
        in_specs=[pl.BlockSpec((r, lanes), lambda i: (i, 0))],
        out_specs=pl.BlockSpec((1, 1, 1), lambda i: (i, 0, 0)),
        compiler_params=pltpu.CompilerParams(
            dimension_semantics=("parallel",), vmem_limit_bytes=vmem_limit),
    )(x.reshape(rows, lanes))
    return jnp.max(partials)


# --------------------------------------------------------------------------------------
# Wrapper (QuantUpsample.forward).
# --------------------------------------------------------------------------------------
def quant_upsample(x, *, size=None, scale_factor=2, mode="nearest"):
    """Dynamic per-tensor int8 fake-quant followed by nearest-neighbour upsampling."""
    if mode != "nearest":
        raise NotImplementedError("only mode='nearest' is implemented")
    # TODO(synk): the `size=` path and non-integer scale factors are not implemented.
    assert size is None
    sf = int(scale_factor)

    N, C, H, W = x.shape
    NC = N * C
    itemsize = jnp.dtype(x.dtype).itemsize
    align = _sublane_align(x.dtype)

    # Chip-aware VMEM budget: 3/4 of physical (48 MiB on v7x, 96 MiB on v5e/v6e), with
    # headroom for compiler-internal scratch.
    vmem_cap = _vmem_capacity_bytes()
    vmem_limit = min((3 * vmem_cap) // 4, 96 << 20)
    budget = vmem_limit - (4 << 20)

    # Layout / replication-matrix mode (see module docstring).
    row_rep_in_matmul = (sf * W) < 128
    if row_rep_in_matmul:
        k = _pick_group(NC * H, -(-128 // (sf * sf * W)), sf * sf * W)
    else:
        k = 1
    M = (NC * H) // k
    in_w = k * W
    out_w = k * sf * sf * W

    rep = _make_rep(W, sf, k, row_rep_in_matmul)
    rep_bytes = int(rep.size) * 2                         # bf16

    x2 = x.reshape(M, in_w)                               # free reshape of NCHW
    out_shape2 = jax.ShapeDtypeStruct((M, out_w), x.dtype)

    in_row_b = max(in_w, 128) * itemsize                  # VMEM rows are lane-padded to 128
    out_row_b = max(out_w, 128) * itemsize

    # ---- Fused fast path: everything fits comfortably in VMEM -> one kernel, one HBM read
    # of x, no separate amax pass. ----
    if 2 * (M * (in_row_b + out_row_b) + rep_bytes) <= min(budget, 24 << 20):
        out2 = pl.pallas_call(
            functools.partial(_fused_kernel, sf=sf, row_rep=row_rep_in_matmul),
            out_shape=out_shape2,
            grid=(1,),
            in_specs=[pl.BlockSpec((M, in_w), lambda i: (0, 0)),
                      pl.BlockSpec(rep.shape, lambda i: (0, 0))],
            out_specs=pl.BlockSpec((M, out_w), lambda i: (0, 0)),
            compiler_params=pltpu.CompilerParams(
                dimension_semantics=("arbitrary",), vmem_limit_bytes=vmem_limit),
        )(x2, rep)
        return out2.reshape(N, C, sf * H, sf * W)

    # ---- Pass 1: abs-max (own lane-dense tiling), final max + scale math hoisted to XLA. ----
    amax = _amax_pallas(x, align, vmem_limit).astype(jnp.float32)
    scale = amax / 127.0
    safe = jnp.where(scale > 0.0, scale, 1.0)
    scales = jnp.stack([1.0 / safe, safe]).astype(jnp.float32)   # [inv_scale, scale] -> SMEM

    # ---- Pass 2: fake-quant + nearest upsample, ~8 MiB output tiles, parallel grid. ----
    # Budget counts double-buffered in + out tiles and the (double-buffered) constant rep;
    # the rep could use pipeline_mode=pl.Buffered(1) but counting it twice keeps us safe.
    per_row = 2 * (in_row_b + out_row_b)
    upper = min(max(budget - 2 * rep_bytes, per_row) // per_row,
                max(align, (8 << 20) // out_row_b))
    R = _pick_rows(M, upper, align)
    nb = M // R
    # TODO(synk): shapes where no sublane-aligned divisor of M exists fall back to a single
    # full-size block, which could exceed VMEM for extremely large inputs.

    out2 = pl.pallas_call(
        functools.partial(_pass2_kernel, sf=sf, row_rep=row_rep_in_matmul),
        out_shape=out_shape2,
        grid=(nb,),
        in_specs=[
            pl.BlockSpec(memory_space=pltpu.MemorySpace.SMEM),   # [1/scale, scale]
            pl.BlockSpec((R, in_w), lambda i: (i, 0)),
            pl.BlockSpec(rep.shape, lambda i: (0, 0)),
        ],
        out_specs=pl.BlockSpec((R, out_w), lambda i: (i, 0)),
        compiler_params=pltpu.CompilerParams(
            dimension_semantics=("parallel",), vmem_limit_bytes=vmem_limit),
    )(scales, x2, rep)

    return out2.reshape(N, C, sf * H, sf * W)


# --------------------------------------------------------------------------------------
# Self-test.
# --------------------------------------------------------------------------------------
def _reference(x, sf):
    amax = jnp.max(jnp.abs(x))
    scale = amax / 127.0
    safe = jnp.where(scale > 0.0, scale, 1.0)
    q = jnp.clip(jnp.round(x * (1.0 / safe)), -127.0, 127.0) * safe
    return jnp.repeat(jnp.repeat(q, sf, axis=2), sf, axis=3)


if __name__ == "__main__":
    # Small shape -> fused single-kernel path.
    x_small = jax.random.normal(jax.random.PRNGKey(0), (2, 4, 16, 16), dtype=jnp.float32)
    y_small = jax.block_until_ready(quant_upsample(x_small, size=None, scale_factor=2,
                                                   mode="nearest"))
    assert y_small.shape == (2, 4, 32, 32), y_small.shape
    ref_small = _reference(x_small, 2)
    assert jnp.allclose(y_small, ref_small, atol=1e-6), \
        float(jnp.max(jnp.abs(y_small - ref_small)))

    # Larger shape -> two-pass (Pallas amax + tiled quant/upsample) path.
    x_big = jax.random.normal(jax.random.PRNGKey(1), (4, 16, 128, 128), dtype=jnp.float32)
    y_big = jax.block_until_ready(quant_upsample(x_big, size=None, scale_factor=2,
                                                 mode="nearest"))
    assert y_big.shape == (4, 16, 256, 256), y_big.shape
    ref_big = _reference(x_big, 2)
    assert jnp.allclose(y_big, ref_big, atol=1e-6), \
        float(jnp.max(jnp.abs(y_big - ref_big)))

    print("KERNEL_OK")
</pallas_src>

<mosaic_0001>
module attributes {stable_mosaic.version = 11 : i64} {
  func.func @_fused_kernel(%arg0: i32, %arg1: memref<64x32xf32, #tpu.memory_space<vmem>>, %arg2: memref<32x128xbf16, #tpu.memory_space<vmem>>, %arg3: memref<64x128xf32, #tpu.memory_space<vmem>>) attributes {dimension_semantics = [#tpu.dimension_semantics<arbitrary>], iteration_bounds = array<i64: 1>, scalar_prefetch = 0 : i64, scratch_operands = 0 : i64, tpu.core_type = #tpu.core_type<tc>, window_params = [{pipeline_mode = #tpu.pipeline_mode<synchronous>, transform_indices = @transform_0, window_bounds = array<i64: 64, 32>}, {pipeline_mode = #tpu.pipeline_mode<synchronous>, transform_indices = @transform_1, window_bounds = array<i64: 32, 128>}, {pipeline_mode = #tpu.pipeline_mode<synchronous>, transform_indices = @transform_2, window_bounds = array<i64: 64, 128>}]} {
    %c0 = arith.constant 0 : index
    %c0_0 = arith.constant 0 : index
    %0 = vector.load %arg1[%c0, %c0_0] : memref<64x32xf32, #tpu.memory_space<vmem>>, vector<64x32xf32>
    %1 = math.absf %0 : vector<64x32xf32>
    %2 = vector.shape_cast %1 : vector<64x32xf32> to vector<1x64x32xf32>
    %cst = arith.constant dense<0xFF800000> : vector<1xf32>
    %3 = vector.multi_reduction <maximumf>, %2, %cst [1, 2] : vector<1x64x32xf32> to vector<1xf32>
    %4 = vector.shape_cast %3 : vector<1xf32> to vector<1x1x1xf32>
    %5 = vector.extract %4[0, 0, 0] : f32 from vector<1x1x1xf32>
    %cst_1 = arith.constant 1.270000e+02 : f32
    %6 = arith.divf %5, %cst_1 : f32
    %cst_2 = arith.constant 0.000000e+00 : f32
    %7 = arith.cmpf ogt, %6, %cst_2 : f32
    %cst_3 = arith.constant 1.000000e+00 : f32
    %8 = arith.select %7, %6, %cst_3 : f32
    %cst_4 = arith.constant 1.000000e+00 : f32
    %9 = arith.divf %cst_4, %8 : f32
    %10 = vector.broadcast %9 : f32 to vector<64x32xf32>
    %11 = arith.mulf %0, %10 : vector<64x32xf32>
    %12 = math.roundeven %11 : vector<64x32xf32>
    %cst_5 = arith.constant -1.270000e+02 : f32
    %cst_6 = arith.constant 1.270000e+02 : f32
    %13 = vector.broadcast %cst_5 : f32 to vector<64x32xf32>
    %14 = arith.maximumf %13, %12 : vector<64x32xf32>
    %15 = vector.broadcast %cst_6 : f32 to vector<64x32xf32>
    %16 = arith.minimumf %15, %14 : vector<64x32xf32>
    %17 = arith.truncf %16 : vector<64x32xf32> to vector<64x32xbf16>
    %c0_7 = arith.constant 0 : index
    %c0_8 = arith.constant 0 : index
    %18 = vector.load %arg2[%c0_7, %c0_8] : memref<32x128xbf16, #tpu.memory_space<vmem>>, vector<32x128xbf16>
    %cst_9 = arith.constant dense<0.000000e+00> : vector<64x128xf32>
    %19 = tpu.matmul %17, %18, %cst_9 {dimension_numbers = #tpu.dot_dimension_numbers<[1], [0], [0], [1], [0, 0, 1, 1], [], []>} : vector<64x32xbf16>, vector<32x128xbf16>, vector<64x128xf32> -> vector<64x128xf32>
    %20 = vector.broadcast %8 : f32 to vector<64x128xf32>
    %21 = arith.mulf %19, %20 : vector<64x128xf32>
    %c0_10 = arith.constant 0 : index
    %c0_11 = arith.constant 0 : index
    %22 = vector.load %arg3[%c0_10, %c0_11] : memref<64x128xf32, #tpu.memory_space<vmem>>, vector<64x128xf32>
    tpu.vector_store %arg3[%c0_10, %c0_11], %21 {strides = array<i32>} : memref<64x128xf32, #tpu.memory_space<vmem>>, vector<64x128xf32>,
    return
  }
  func.func @transform_0(%arg0: i32) -> (i32, i32) {
    %c0_i32 = arith.constant 0 : i32
    %c0_i32_0 = arith.constant 0 : i32
    %c0_i32_1 = arith.constant 0 : i32
    return %c0_i32, %c0_i32_0 : i32, i32
  }
  func.func @transform_1(%arg0: i32) -> (i32, i32) {
    %c0_i32 = arith.constant 0 : i32
    %c0_i32_0 = arith.constant 0 : i32
    %c0_i32_1 = arith.constant 0 : i32
    return %c0_i32, %c0_i32_0 : i32, i32
  }
  func.func @transform_2(%arg0: i32) -> (i32, i32) {
    %c0_i32 = arith.constant 0 : i32
    %c0_i32_0 = arith.constant 0 : i32
    %c0_i32_1 = arith.constant 0 : i32
    return %c0_i32, %c0_i32_0 : i32, i32
  }
}

</mosaic_0001>

<llo_original>
// kernel: tpu_custom_call.1
$region0: #{tpu_custom_call.1}
  #allocation0 [shape = 'u32[]', space=smem, size = 0x4, offset = 0x4, fixed_abs, tag = 'smem constant byte address 0x4 - core index']
  #allocation1 [shape = 'u32[144,128]{1,0:T(1,128)}', space=vmem, size = 0x12000, scoped, tag = 'internal scratch']
  %s0 = inlined_call_operand.vmem [shape: f32[64,32], index: 0, kind: input, shape index: {}]
  %s1 = inlined_call_operand.vmem [shape: bf16[32,128], index: 1, kind: input, shape index: {}]
  %s2 = inlined_call_operand.hbm [shape: f32[64,128], index: 2, kind: output, shape index: {}]
  %s3 = sld [smem:[#allocation0]]
  $region18: #{tpu_custom_call.1} parent=0
    _
  %s5 = ssub.s32 1, %s3
  %s6 = scalar_select 0, %s5, %s3
  $region1: #{tpu_custom_call.1} parent=0
    #allocation2 [shape = 'u8[32768]{0}', space=vmem, size = 0x8000, scoped, tag = 'output window, operand 0, single buffered']
    #allocation3 [shape = 's32[1]{0}', space=sflag, size = 0x4, scoped, tag = 'scoped memory for tpu_custom_call.1']
    %7 = vsyncpa [#allocation3], 0
    // Predicated region
    $region2: #{tpu_custom_call.1} parent=1 // pred_check
      _
    $region3: #{tpu_custom_call.1} parent=1 // pred_check_branch
      %9 = sbr.rel (0) target = $region5
    $region4: #{tpu_custom_call.1} parent=1 // pred_region
      _
    $region5: #{tpu_custom_call.1} parent=1 // pred_fallthru
      _
    // Predicated region
    $region6: #{tpu_custom_call.1} parent=1 // pred_check
      _
    $region7: #{tpu_custom_call.1} parent=1 // pred_check_branch
      %11 = sbr.rel (0) target = $region9
    $region8: #{tpu_custom_call.1} parent=1 // pred_region
      _
    $region9: #{tpu_custom_call.1} parent=1 // pred_fallthru
      _
    %v13 = vld [vmem:[%s0] sm:$0xff]
    %v14 = vld [vmem:[%s0 + $0x8] sm:$0xff]
    %v15 = vld [vmem:[%s0 + $0x10] sm:$0xff]
    %v16 = vld [vmem:[%s0 + $0x18] sm:$0xff]
    %v17 = vld [vmem:[%s0 + $0x20] sm:$0xff]
    %v18 = vld [vmem:[%s0 + $0x28] sm:$0xff]
    %v19 = vld [vmem:[%s0 + $0x30] sm:$0xff]
    %v20 = vld [vmem:[%s0 + $0x38] sm:$0xff]
    %v21 = vand.u32 2147483647, %v13
    %v22 = vand.u32 2147483647, %v14
    %v23 = vand.u32 2147483647, %v15
    %v24 = vand.u32 2147483647, %v16
    %v25 = vand.u32 2147483647, %v17
    %v26 = vand.u32 2147483647, %v18
    %v27 = vand.u32 2147483647, %v19
    %v28 = vand.u32 2147483647, %v20
    %vm29 = vcmask 261120
    %v30 = vsel %vm29, %v21, -inf
    %v31 = vsel %vm29, %v22, -inf
    %v32 = vsel %vm29, %v23, -inf
    %v33 = vsel %vm29, %v24, -inf
    %v34 = vsel %vm29, %v25, -inf
    %v35 = vmax.f32 %v30, %v34
    %v36 = vsel %vm29, %v26, -inf
    %v37 = vmax.f32 %v31, %v36
    %v38 = vsel %vm29, %v27, -inf
    %v39 = vmax.f32 %v32, %v38
    %v40 = vsel %vm29, %v28, -inf
    %v41 = vmax.f32 %v33, %v40
    %v42 = vmax.f32 %v35, %v37
    %v43 = vmax.f32 %v39, %v41
    %v44 = vmax.f32 %v42, %v43
    %45 = vmax.xlane.f32.xlu0 %v44
    %v46 = vpop.xlane.xlu0 %45
    %v47 = vrot.slane %v46, 4
    %v48 = vmax.f32 %v46, %v47
    %v49 = vrot.slane %v48, 2
    %v50 = vmax.f32 %v48, %v49
    %v51 = vrot.slane %v50, 1
    %v52 = vmax.f32 %v50, %v51
    %s53 = vtos %v52
    %v54 = vrcp.pop 127.0
    %s55 = vtos %v54
    %s56 = smul.f32 %s53, %s55
    %p57 = scmp.gt.f32.partialorder %s56, 0.0
    %s58 = scalar_select %p57, %s56, 1.0
    %v59 = vstv %s58
    %v60 = vrcp.pop %v59
    %s61 = vtos %v60
    %v62 = vstv %s61
    %v63 = vmul.f32 %v13, %v62
    %v64 = vmul.f32 %v14, %v62
    %v65 = vmul.f32 %v15, %v62
    %v66 = vmul.f32 %v16, %v62
    %v67 = vmul.f32 %v17, %v62
    %v68 = vmul.f32 %v18, %v62
    %v69 = vmul.f32 %v19, %v62
    %v70 = vmul.f32 %v20, %v62
    %v71 = vround.ne.pseudo %v63
    %v72 = vround.ne.pseudo %v64
    %v73 = vround.ne.pseudo %v65
    %v74 = vround.ne.pseudo %v66
    %v75 = vround.ne.pseudo %v67
    %v76 = vround.ne.pseudo %v68
    %v77 = vround.ne.pseudo %v69
    %v78 = vround.ne.pseudo %v70
    %v79 = vmax.f32 %v71, -127.0
    %v80 = vmax.f32 %v72, -127.0
    %v81 = vmax.f32 %v73, -127.0
    %v82 = vmax.f32 %v74, -127.0
    %v83 = vmax.f32 %v75, -127.0
    %v84 = vmax.f32 %v76, -127.0
    %v85 = vmax.f32 %v77, -127.0
    %v86 = vmax.f32 %v78, -127.0
    %v87 = vmin.f32 %v79, 127.0
    %v88 = vmin.f32 %v80, 127.0
    %v89 = vmin.f32 %v81, 127.0
    %v90 = vmin.f32 %v82, 127.0
    %v91 = vmin.f32 %v83, 127.0
    %v92 = vmin.f32 %v84, 127.0
    %v93 = vmin.f32 %v85, 127.0
    %v94 = vmin.f32 %v86, 127.0
    %v95 = vpack.c.bf16 %v88, %v87
    %v96 = vpack.c.bf16 %v90, %v89
    %v97 = vpack.c.bf16 %v92, %v91
    %v98 = vpack.c.bf16 %v94, %v93
    %v99 = vld [vmem:[%s1] sm:$0xf]
    %v100 = vld [vmem:[%s1 + $0x4] sm:$0xf]
    %v101 = vld [vmem:[%s1 + $0x8] sm:$0xf]
    %v102 = vld [vmem:[%s1 + $0xc] sm:$0xf]
    %v107 = vunpack.c.l.b16 %v99
    %v108 = vunpack.c.l.b16 %v100
    %v109 = vunpack.c.l.b16 %v101
    %v110 = vunpack.c.l.b16 %v102
    %v111 = vpack.c.b16 %v108, %v107
    %v112 = vpack.c.b16 %v110, %v109
    %v116 = vsel %vm29, %v95, 0
    %v119 = vsel %vm29, %v96, 0
    %v122 = vsel %vm29, %v97, 0
    %v125 = vsel %vm29, %v98, 0
    %127 = vmatprep.subr.bf16.mxu0 0
    %128 = vmatpush1.bf16.msra.mxu0 %v111
    %129 = vmatprep.subr.bf16.mxu0 0
    %130 = vmatpush1.bf16.msra.mxu0 %v112
    %131 = vmatprep.subr.bf16.mxu0 0
    %132 = vmatpush1.bf16.msra.mxu0 0
    %133 = vmatprep.subr.bf16.mxu0 0
    %134 = vmatpush1.bf16.msra.mxu0 0
    %135 = vmatprep.subr.bf16.mxu0 0
    %136 = vmatpush1.bf16.msra.mxu0 0
    %137 = vmatprep.subr.bf16.mxu0 0
    %138 = vmatpush1.bf16.msra.mxu0 0
    %139 = vmatprep.subr.bf16.mxu0 0
    %140 = vmatpush1.bf16.msra.mxu0 0
    %141 = vmatprep.subr.bf16.mxu0 0
    %142 = vmatpush1.bf16.msra.mxu0 0
    %143 = vmatprep.subr.bf16.mxu0 0
    %144 = vmatpush1.bf16.msra.mxu0 0
    %145 = vmatprep.subr.bf16.mxu0 0
    %146 = vmatpush1.bf16.msra.mxu0 0
    %147 = vmatprep.subr.bf16.mxu0 0
    %148 = vmatpush1.bf16.msra.mxu0 0
    %149 = vmatprep.subr.bf16.mxu0 0
    %150 = vmatpush1.bf16.msra.mxu0 0
    %151 = vmatprep.subr.bf16.mxu0 0
    %152 = vmatpush1.bf16.msra.mxu0 0
    %153 = vmatprep.subr.bf16.mxu0 0
    %154 = vmatpush1.bf16.msra.mxu0 0
    %155 = vmatprep.subr.bf16.mxu0 0
    %156 = vmatpush1.bf16.msra.mxu0 0
    %157 = vmatprep.subr.bf16.mxu0 0
    %158 = vmatpush1.bf16.msra.mxu0 0
    %159 = vmatprep.mubr.bf16.mxu0 0
    %160 = vmatmul.mubr.bf16.gmra.mrb[0].mxu0 %v116
    %v161 = vpop.f32.mrb[0].mxu0
    %v162 = vadd.f32 0.0, %v161
    %v163 = vpop.f32.mrb[0].mxu0
    %v164 = vpop.f32.mrb[0].mxu0
    %v165 = vadd.f32 0.0, %v164
    %v166 = vpop.f32.mrb[0].mxu0
    %167 = vmatprep.mubr.bf16.mxu0 0
    %168 = vmatmul.mubr.bf16.gmra.mrb[0].mxu0 %v119
    %v169 = vpop.f32.mrb[0].mxu0
    %v170 = vadd.f32 0.0, %v169
    %v171 = vpop.f32.mrb[0].mxu0
    %v172 = vpop.f32.mrb[0].mxu0
    %v173 = vadd.f32 0.0, %v172
    %v174 = vpop.f32.mrb[0].mxu0
    %175 = vmatprep.mubr.bf16.mxu0 0
    %176 = vmatmul.mubr.bf16.gmra.mrb[0].mxu0 %v122
    %v177 = vpop.f32.mrb[0].mxu0
    %v178 = vadd.f32 0.0, %v177
    %v179 = vpop.f32.mrb[0].mxu0
    %v180 = vpop.f32.mrb[0].mxu0
    %v181 = vadd.f32 0.0, %v180
    %v182 = vpop.f32.mrb[0].mxu0
    %183 = vmatprep.mubr.bf16.mxu0 0
    %184 = vmatmul.mubr.bf16.gmra.mrb[0].mxu0 %v125
    %v185 = vpop.f32.mrb[0].mxu0
    %v186 = vadd.f32 0.0, %v185
    %v187 = vpop.f32.mrb[0].mxu0
    %v188 = vpop.f32.mrb[0].mxu0
    %v189 = vadd.f32 0.0, %v188
    %v190 = vpop.f32.mrb[0].mxu0
    %191 = vdwg.mxu0
    %v192 = vstv %s58
    %v193 = vmul.f32 %v162, %v192
    %v194 = vmul.f32 %v165, %v192
    %v195 = vmul.f32 %v170, %v192
    %v196 = vmul.f32 %v173, %v192
    %v197 = vmul.f32 %v178, %v192
    %v198 = vmul.f32 %v181, %v192
    %v199 = vmul.f32 %v186, %v192
    %v200 = vmul.f32 %v189, %v192
    %201 = vst [vmem:[#allocation2] sm:$0xff] %v193
    %202 = vst [vmem:[#allocation2 + $0x8] sm:$0xff] %v194
    %203 = vst [vmem:[#allocation2 + $0x10] sm:$0xff] %v195
    %204 = vst [vmem:[#allocation2 + $0x18] sm:$0xff] %v196
    %205 = vst [vmem:[#allocation2 + $0x20] sm:$0xff] %v197
    %206 = vst [vmem:[#allocation2 + $0x28] sm:$0xff] %v198
    %207 = vst [vmem:[#allocation2 + $0x30] sm:$0xff] %v199
    %208 = vst [vmem:[#allocation2 + $0x38] sm:$0xff] %v200
    // Predicated region
    $region10: #{tpu_custom_call.1} parent=1 // pred_check
      _
    $region11: #{tpu_custom_call.1} parent=1 // pred_check_branch
      %210 = sbr.rel (0) target = $region13
    $region12: #{tpu_custom_call.1} parent=1 // pred_region
      %s212 = ssub.s32 1024, 1024
      %213 = vsyncadd [#allocation3], %s212
      %s214 = sshll.u32 [#allocation2], 4
      %s215 = int_to_ptr.vmem [resolvable:$true] %s214
      %220 = dma.vmem_to_hbm [thread:$0]  %s215, 1024, %s2, [#allocation3], 128, 128, 8
    $region13: #{tpu_custom_call.1} parent=1 // pred_fallthru
      _
    // Predicated region
    $region14: #{tpu_custom_call.1} parent=1 // pred_check
      _
    $region15: #{tpu_custom_call.1} parent=1 // pred_check_branch
      %222 = sbr.rel (0) target = $region17
    $region16: #{tpu_custom_call.1} parent=1 // pred_region
      %223 = dma.done [#allocation3], 1024
    $region17: #{tpu_custom_call.1} parent=1 // pred_fallthru
      _
    %224 = vsyncpa [#allocation3], 1

</llo_original>
